<compile_context>
chip_gen: v7x
topology: tpu7x:2x2x1
jax: 0.10.0
libtpu: 0.0.40
codegen_flags: <defaults>
</compile_context>

<pallas_src>
import jax
import jax.numpy as jnp
from jax.experimental import pallas as pl
from jax.experimental.pallas import tpu as pltpu

_DIMS = [(180, 80), (80, 24), (24, 18), (18, 1)]   # torch Linear (in, out) per layer
_PAD = 128                                         # lane-dense width for hidden/output
_IN = 180


def _round_up(n, m):
    return (n + m - 1) // m * m


def _mlp_kernel(x_ref,
                w1_ref, b1_ref,
                w2_ref, b2_ref,
                w3_ref, b3_ref,
                w4_ref, b4_ref,
                o_ref):
    # Matmul inputs are in the weight dtype (f32 or bf16); accumulation, bias
    # adds, ReLU and sigmoid are always f32 (v5e-safe, accuracy-preserving).
    wdt = w1_ref.dtype
    x = x_ref[...].astype(wdt)

    h = jnp.dot(x, w1_ref[...], preferred_element_type=jnp.float32) + b1_ref[...]
    h = jnp.maximum(h, 0.0)

    h = jnp.dot(h.astype(wdt), w2_ref[...], preferred_element_type=jnp.float32) + b2_ref[...]
    h = jnp.maximum(h, 0.0)

    h = jnp.dot(h.astype(wdt), w3_ref[...], preferred_element_type=jnp.float32) + b3_ref[...]
    h = jnp.maximum(h, 0.0)

    z = jnp.dot(h.astype(wdt), w4_ref[...], preferred_element_type=jnp.float32) + b4_ref[...]
    o_ref[...] = jax.nn.sigmoid(z).astype(o_ref.dtype)   # full 128-lane store


def init_params(key):
    """PyTorch-Linear-style uniform(-1/sqrt(fan_in), 1/sqrt(fan_in)) init.
    Weights stored as (in, out) (transpose of torch weight), biases (1, out)."""
    params = {}
    for idx, (fan_in, fan_out) in enumerate(_DIMS, start=1):
        key, kw, kb = jax.random.split(key, 3)
        bound = 1.0 / jnp.sqrt(float(fan_in))
        params[f"w{idx}"] = jax.random.uniform(
            kw, (fan_in, fan_out), jnp.float32, minval=-bound, maxval=bound)
        params[f"b{idx}"] = jax.random.uniform(
            kb, (1, fan_out), jnp.float32, minval=-bound, maxval=bound)
    return params


def pad_and_cast_params(params, weight_dtype=jnp.float32):
    """Zero-pad every layer's output width (and hidden input widths) to 128 lanes.
    Done once, outside the kernel. Padding lanes stay exactly zero through the
    ReLU chain, so the math is unchanged; the real output is column 0 of layer 4.
    Weights optionally cast to bf16 (MXU input dtype); biases stay f32."""
    padded = {}
    in_dims = [_IN, _PAD, _PAD, _PAD]
    for idx, (fan_in, fan_out) in enumerate(_DIMS, start=1):
        w = params[f"w{idx}"]
        b = params[f"b{idx}"]
        wp = jnp.zeros((in_dims[idx - 1], _PAD), jnp.float32).at[:fan_in, :fan_out].set(w)
        bp = jnp.zeros((1, _PAD), jnp.float32).at[:, :fan_out].set(b)
        padded[f"w{idx}"] = wp.astype(weight_dtype)
        padded[f"b{idx}"] = bp
    return padded


def net_forward(x, padded_params, *, tile_b=1024, compute_dtype=jnp.float32):
    """Forward pass. `padded_params` from pad_and_cast_params()."""
    B, F = x.shape
    assert F == _IN, f"expected {_IN} input features, got {F}"

    tile_b = min(tile_b, _round_up(B, 8))        # keep sublane-aligned blocks
    b_pad = _round_up(B, tile_b)

    x = x.astype(compute_dtype)                  # bf16 halves x HBM traffic on v6e/v7x
    if b_pad != B:
        x = jnp.pad(x, ((0, b_pad - B), (0, 0)))

    grid = (pl.cdiv(b_pad, tile_b),)
    const_map = lambda i: (0, 0)

    in_specs = [pl.BlockSpec((tile_b, _IN), lambda i: (i, 0))]
    call_args = [x]
    for idx in range(1, 5):
        w = padded_params[f"w{idx}"]
        b = padded_params[f"b{idx}"]
        in_specs.append(pl.BlockSpec(w.shape, const_map))   # VMEM-resident, DMA'd once
        in_specs.append(pl.BlockSpec(b.shape, const_map))
        call_args += [w, b]

    flops = 2 * b_pad * (_IN * _PAD + 3 * _PAD * _PAD)
    bytes_accessed = (
        x.size * x.dtype.itemsize
        + sum(p.size * p.dtype.itemsize for p in padded_params.values())
        + b_pad * _PAD * 4
    )

    out = pl.pallas_call(
        _mlp_kernel,
        out_shape=jax.ShapeDtypeStruct((b_pad, _PAD), jnp.float32),
        grid=grid,
        in_specs=in_specs,
        out_specs=pl.BlockSpec((tile_b, _PAD), lambda i: (i, 0)),
        compiler_params=pltpu.CompilerParams(
            dimension_semantics=("parallel",),      # shard batch tiles across TCs (v7x)
            vmem_limit_bytes=32 * 1024 * 1024,      # safe on v5e/v6e/v7x
        ),
        cost_estimate=pl.CostEstimate(
            flops=flops,
            transcendentals=b_pad * _PAD,
            bytes_accessed=bytes_accessed,
        ),
    )(*call_args)

    return out[:B, :1]   # real scalar output lives in lane 0


def _reference_forward(x, params):
    h = jnp.maximum(x.astype(jnp.float32) @ params["w1"] + params["b1"], 0.0)
    h = jnp.maximum(h @ params["w2"] + params["b2"], 0.0)
    h = jnp.maximum(h @ params["w3"] + params["b3"], 0.0)
    return jax.nn.sigmoid(h @ params["w4"] + params["b4"])


if __name__ == "__main__":
    key = jax.random.PRNGKey(0)
    key_x, key_p = jax.random.split(key)
    params = init_params(key_p)

    # --- strict f32 path (matches torch `x.float()` semantics exactly) ---
    B = 8
    x = jax.random.normal(key_x, (B, 180), dtype=jnp.float32)
    p_f32 = pad_and_cast_params(params, jnp.float32)
    out = jax.block_until_ready(net_forward(x, p_f32, tile_b=8))
    ref = _reference_forward(x, params)
    assert out.shape == (B, 1)
    assert jnp.allclose(out, ref, atol=1e-5, rtol=1e-5)

    # --- multi-tile grid, ragged batch, bf16-input path (v6e/v7x bandwidth opt) ---
    B2 = 50
    x2 = jax.random.normal(key_x, (B2, 180), dtype=jnp.float32)
    p_bf16 = pad_and_cast_params(params, jnp.bfloat16)
    out2 = jax.block_until_ready(
        net_forward(x2, p_bf16, tile_b=16, compute_dtype=jnp.bfloat16))
    ref2 = _reference_forward(x2, params)
    assert out2.shape == (B2, 1)
    assert jnp.allclose(out2, ref2, atol=2e-2, rtol=2e-2)

    print("KERNEL_OK")
</pallas_src>

<mosaic_0001>
module attributes {stable_mosaic.version = 11 : i64} {
  func.func @_mlp_kernel(%arg0: i32, %arg1: memref<8x180xf32, #tpu.memory_space<vmem>>, %arg2: memref<180x128xf32, #tpu.memory_space<vmem>>, %arg3: memref<1x128xf32, #tpu.memory_space<vmem>>, %arg4: memref<128x128xf32, #tpu.memory_space<vmem>>, %arg5: memref<1x128xf32, #tpu.memory_space<vmem>>, %arg6: memref<128x128xf32, #tpu.memory_space<vmem>>, %arg7: memref<1x128xf32, #tpu.memory_space<vmem>>, %arg8: memref<128x128xf32, #tpu.memory_space<vmem>>, %arg9: memref<1x128xf32, #tpu.memory_space<vmem>>, %arg10: memref<8x128xf32, #tpu.memory_space<vmem>>) attributes {dimension_semantics = [#tpu.dimension_semantics<parallel>], iteration_bounds = array<i64: 1>, scalar_prefetch = 0 : i64, scratch_operands = 0 : i64, tpu.core_type = #tpu.core_type<tc>, window_params = [{transform_indices = @transform_0, window_bounds = array<i64: 8, 180>}, {pipeline_mode = #tpu.pipeline_mode<synchronous>, transform_indices = @transform_1, window_bounds = array<i64: 180, 128>}, {pipeline_mode = #tpu.pipeline_mode<synchronous>, transform_indices = @transform_2, window_bounds = array<i64: 1, 128>}, {pipeline_mode = #tpu.pipeline_mode<synchronous>, transform_indices = @transform_3, window_bounds = array<i64: 128, 128>}, {pipeline_mode = #tpu.pipeline_mode<synchronous>, transform_indices = @transform_4, window_bounds = array<i64: 1, 128>}, {pipeline_mode = #tpu.pipeline_mode<synchronous>, transform_indices = @transform_5, window_bounds = array<i64: 128, 128>}, {pipeline_mode = #tpu.pipeline_mode<synchronous>, transform_indices = @transform_6, window_bounds = array<i64: 1, 128>}, {pipeline_mode = #tpu.pipeline_mode<synchronous>, transform_indices = @transform_7, window_bounds = array<i64: 128, 128>}, {pipeline_mode = #tpu.pipeline_mode<synchronous>, transform_indices = @transform_8, window_bounds = array<i64: 1, 128>}, {transform_indices = @transform_9, window_bounds = array<i64: 8, 128>}]} {
    %c0 = arith.constant 0 : index
    %c0_0 = arith.constant 0 : index
    %0 = vector.load %arg1[%c0, %c0_0] : memref<8x180xf32, #tpu.memory_space<vmem>>, vector<8x180xf32>
    %c0_1 = arith.constant 0 : index
    %c0_2 = arith.constant 0 : index
    %1 = vector.load %arg2[%c0_1, %c0_2] : memref<180x128xf32, #tpu.memory_space<vmem>>, vector<180x128xf32>
    %cst = arith.constant dense<0.000000e+00> : vector<8x128xf32>
    %2 = tpu.matmul %0, %1, %cst {dimension_numbers = #tpu.dot_dimension_numbers<[1], [0], [0], [1], [0, 0, 1, 1], [], []>} : vector<8x180xf32>, vector<180x128xf32>, vector<8x128xf32> -> vector<8x128xf32>
    %c0_3 = arith.constant 0 : index
    %c0_4 = arith.constant 0 : index
    %3 = vector.load %arg3[%c0_3, %c0_4] : memref<1x128xf32, #tpu.memory_space<vmem>>, vector<1x128xf32>
    %4 = vector.broadcast %3 : vector<1x128xf32> to vector<8x128xf32>
    %5 = arith.addf %2, %4 : vector<8x128xf32>
    %cst_5 = arith.constant 0.000000e+00 : f32
    %6 = vector.broadcast %cst_5 : f32 to vector<8x128xf32>
    %7 = arith.maximumf %5, %6 : vector<8x128xf32>
    %c0_6 = arith.constant 0 : index
    %c0_7 = arith.constant 0 : index
    %8 = vector.load %arg4[%c0_6, %c0_7] : memref<128x128xf32, #tpu.memory_space<vmem>>, vector<128x128xf32>
    %cst_8 = arith.constant dense<0.000000e+00> : vector<8x128xf32>
    %9 = tpu.matmul %7, %8, %cst_8 {dimension_numbers = #tpu.dot_dimension_numbers<[1], [0], [0], [1], [0, 0, 1, 1], [], []>} : vector<8x128xf32>, vector<128x128xf32>, vector<8x128xf32> -> vector<8x128xf32>
    %c0_9 = arith.constant 0 : index
    %c0_10 = arith.constant 0 : index
    %10 = vector.load %arg5[%c0_9, %c0_10] : memref<1x128xf32, #tpu.memory_space<vmem>>, vector<1x128xf32>
    %11 = vector.broadcast %10 : vector<1x128xf32> to vector<8x128xf32>
    %12 = arith.addf %9, %11 : vector<8x128xf32>
    %cst_11 = arith.constant 0.000000e+00 : f32
    %13 = vector.broadcast %cst_11 : f32 to vector<8x128xf32>
    %14 = arith.maximumf %12, %13 : vector<8x128xf32>
    %c0_12 = arith.constant 0 : index
    %c0_13 = arith.constant 0 : index
    %15 = vector.load %arg6[%c0_12, %c0_13] : memref<128x128xf32, #tpu.memory_space<vmem>>, vector<128x128xf32>
    %cst_14 = arith.constant dense<0.000000e+00> : vector<8x128xf32>
    %16 = tpu.matmul %14, %15, %cst_14 {dimension_numbers = #tpu.dot_dimension_numbers<[1], [0], [0], [1], [0, 0, 1, 1], [], []>} : vector<8x128xf32>, vector<128x128xf32>, vector<8x128xf32> -> vector<8x128xf32>
    %c0_15 = arith.constant 0 : index
    %c0_16 = arith.constant 0 : index
    %17 = vector.load %arg7[%c0_15, %c0_16] : memref<1x128xf32, #tpu.memory_space<vmem>>, vector<1x128xf32>
    %18 = vector.broadcast %17 : vector<1x128xf32> to vector<8x128xf32>
    %19 = arith.addf %16, %18 : vector<8x128xf32>
    %cst_17 = arith.constant 0.000000e+00 : f32
    %20 = vector.broadcast %cst_17 : f32 to vector<8x128xf32>
    %21 = arith.maximumf %19, %20 : vector<8x128xf32>
    %c0_18 = arith.constant 0 : index
    %c0_19 = arith.constant 0 : index
    %22 = vector.load %arg8[%c0_18, %c0_19] : memref<128x128xf32, #tpu.memory_space<vmem>>, vector<128x128xf32>
    %cst_20 = arith.constant dense<0.000000e+00> : vector<8x128xf32>
    %23 = tpu.matmul %21, %22, %cst_20 {dimension_numbers = #tpu.dot_dimension_numbers<[1], [0], [0], [1], [0, 0, 1, 1], [], []>} : vector<8x128xf32>, vector<128x128xf32>, vector<8x128xf32> -> vector<8x128xf32>
    %c0_21 = arith.constant 0 : index
    %c0_22 = arith.constant 0 : index
    %24 = vector.load %arg9[%c0_21, %c0_22] : memref<1x128xf32, #tpu.memory_space<vmem>>, vector<1x128xf32>
    %25 = vector.broadcast %24 : vector<1x128xf32> to vector<8x128xf32>
    %26 = arith.addf %23, %25 : vector<8x128xf32>
    %27 = arith.negf %26 : vector<8x128xf32>
    %28 = math.exp %27 : vector<8x128xf32>
    %cst_23 = arith.constant 1.000000e+00 : f32
    %29 = vector.broadcast %cst_23 : f32 to vector<8x128xf32>
    %30 = arith.addf %29, %28 : vector<8x128xf32>
    %31 = arith.divf %29, %30 : vector<8x128xf32>
    %c0_24 = arith.constant 0 : index
    %c0_25 = arith.constant 0 : index
    %32 = vector.load %arg10[%c0_24, %c0_25] : memref<8x128xf32, #tpu.memory_space<vmem>>, vector<8x128xf32>
    tpu.vector_store %arg10[%c0_24, %c0_25], %31 {strides = array<i32>} : memref<8x128xf32, #tpu.memory_space<vmem>>, vector<8x128xf32>,
    return
  }
  func.func @transform_0(%arg0: i32) -> (i32, i32) {
    %c0_i32 = arith.constant 0 : i32
    %c0_i32_0 = arith.constant 0 : i32
    return %arg0, %c0_i32 : i32, i32
  }
  func.func @transform_1(%arg0: i32) -> (i32, i32) {
    %c0_i32 = arith.constant 0 : i32
    %c0_i32_0 = arith.constant 0 : i32
    %c0_i32_1 = arith.constant 0 : i32
    return %c0_i32, %c0_i32_0 : i32, i32
  }
  func.func @transform_2(%arg0: i32) -> (i32, i32) {
    %c0_i32 = arith.constant 0 : i32
    %c0_i32_0 = arith.constant 0 : i32
    %c0_i32_1 = arith.constant 0 : i32
    return %c0_i32, %c0_i32_0 : i32, i32
  }
  func.func @transform_3(%arg0: i32) -> (i32, i32) {
    %c0_i32 = arith.constant 0 : i32
    %c0_i32_0 = arith.constant 0 : i32
    %c0_i32_1 = arith.constant 0 : i32
    return %c0_i32, %c0_i32_0 : i32, i32
  }
  func.func @transform_4(%arg0: i32) -> (i32, i32) {
    %c0_i32 = arith.constant 0 : i32
    %c0_i32_0 = arith.constant 0 : i32
    %c0_i32_1 = arith.constant 0 : i32
    return %c0_i32, %c0_i32_0 : i32, i32
  }
  func.func @transform_5(%arg0: i32) -> (i32, i32) {
    %c0_i32 = arith.constant 0 : i32
    %c0_i32_0 = arith.constant 0 : i32
    %c0_i32_1 = arith.constant 0 : i32
    return %c0_i32, %c0_i32_0 : i32, i32
  }
  func.func @transform_6(%arg0: i32) -> (i32, i32) {
    %c0_i32 = arith.constant 0 : i32
    %c0_i32_0 = arith.constant 0 : i32
    %c0_i32_1 = arith.constant 0 : i32
    return %c0_i32, %c0_i32_0 : i32, i32
  }
  func.func @transform_7(%arg0: i32) -> (i32, i32) {
    %c0_i32 = arith.constant 0 : i32
    %c0_i32_0 = arith.constant 0 : i32
    %c0_i32_1 = arith.constant 0 : i32
    return %c0_i32, %c0_i32_0 : i32, i32
  }
  func.func @transform_8(%arg0: i32) -> (i32, i32) {
    %c0_i32 = arith.constant 0 : i32
    %c0_i32_0 = arith.constant 0 : i32
    %c0_i32_1 = arith.constant 0 : i32
    return %c0_i32, %c0_i32_0 : i32, i32
  }
  func.func @transform_9(%arg0: i32) -> (i32, i32) {
    %c0_i32 = arith.constant 0 : i32
    %c0_i32_0 = arith.constant 0 : i32
    return %arg0, %c0_i32 : i32, i32
  }
}

</mosaic_0001>

<llo_original>
// kernel: tpu_custom_call.1
$region0: #{tpu_custom_call.1}
  #allocation0 [shape = 'u32[]', space=smem, size = 0x4, offset = 0x4, fixed_abs, tag = 'smem constant byte address 0x4 - core index']
  #allocation1 [shape = 'u32[144,128]{1,0:T(1,128)}', space=vmem, size = 0x12000, scoped, tag = 'internal scratch']
  %s0 = inlined_call_operand.hbm [shape: f32[8,180], index: 0, kind: input, shape index: {}]
  %s1 = inlined_call_operand.hbm [shape: f32[180,128], index: 1, kind: input, shape index: {}]
  %s2 = inlined_call_operand.vmem [shape: f32[1,128], index: 2, kind: input, shape index: {}]
  %s3 = inlined_call_operand.hbm [shape: f32[128,128], index: 3, kind: input, shape index: {}]
  %s4 = inlined_call_operand.vmem [shape: f32[1,128], index: 4, kind: input, shape index: {}]
  %s5 = inlined_call_operand.hbm [shape: f32[128,128], index: 5, kind: input, shape index: {}]
  %s6 = inlined_call_operand.vmem [shape: f32[1,128], index: 6, kind: input, shape index: {}]
  %s7 = inlined_call_operand.hbm [shape: f32[128,128], index: 7, kind: input, shape index: {}]
  %s8 = inlined_call_operand.vmem [shape: f32[1,128], index: 8, kind: input, shape index: {}]
  %s9 = inlined_call_operand.hbm [shape: f32[8,128], index: 9, kind: output, shape index: {}]
  %s10 = sld [smem:[#allocation0]]
  $region66: #{tpu_custom_call.1} parent=0
    _
  %s12 = ssub.s32 1, %s10
  %s13 = scalar_select 0, %s12, %s10
  $region1: #{tpu_custom_call.1} parent=0
    #allocation2 [shape = 'u8[8192]{0}', space=vmem, size = 0x2000, scoped, tag = 'input window, operand 0, single buffered']
    #allocation3 [shape = 's32[1]{0}', space=sflag, size = 0x4, scoped, tag = 'scoped memory for tpu_custom_call.1']
    #allocation4 [shape = 's32[1]{0}', space=sflag, size = 0x4, scoped, tag = 'scoped memory for tpu_custom_call.1']
    #allocation5 [shape = 'u8[94208]{0}', space=vmem, size = 0x17000, scoped, tag = 'input window, operand 1, single buffered']
    #allocation6 [shape = 's32[1]{0}', space=sflag, size = 0x4, scoped, tag = 'scoped memory for tpu_custom_call.1']
    #allocation7 [shape = 'u8[65536]{0}', space=vmem, size = 0x10000, scoped, tag = 'input window, operand 3, single buffered']
    #allocation8 [shape = 'u8[65536]{0}', space=vmem, size = 0x10000, scoped, tag = 'input window, operand 5, single buffered']
    #allocation9 [shape = 's32[1]{0}', space=sflag, size = 0x4, scoped, tag = 'scoped memory for tpu_custom_call.1']
    #allocation10 [shape = 'u8[65536]{0}', space=vmem, size = 0x10000, scoped, tag = 'input window, operand 7, single buffered']
    #allocation11 [shape = 'u8[4096]{0}', space=vmem, size = 0x1000, scoped, tag = 'output window, operand 0, single buffered']
    %14 = vsyncpa [#allocation3], 0
    %15 = vsyncpa [#allocation6], 0
    %16 = vsyncpa [#allocation9], 0
    %17 = vsyncpa [#allocation4], 0
    // Predicated region
    $region2: #{tpu_custom_call.1} parent=1 // pred_check
      _
    $region3: #{tpu_custom_call.1} parent=1 // pred_check_branch
      %19 = sbr.rel (0) target = $region5
    $region4: #{tpu_custom_call.1} parent=1 // pred_region
      %s21 = ssub.s32 256, 256
      %22 = vsyncadd [#allocation3], %s21
      %s24 = sshll.u32 [#allocation2], 4
      %s25 = int_to_ptr.vmem [resolvable:$true] %s24
      %27 = dma.hbm_to_vmem [thread:$0]  %s0, 256, %s25, [#allocation3]
    $region5: #{tpu_custom_call.1} parent=1 // pred_fallthru
      _
    // Predicated region
    $region6: #{tpu_custom_call.1} parent=1 // pred_check
      _
    $region7: #{tpu_custom_call.1} parent=1 // pred_check_branch
      %29 = sbr.rel (0) target = $region9
    $region8: #{tpu_custom_call.1} parent=1 // pred_region
      %s31 = ssub.s32 2944, 2944
      %32 = vsyncadd [#allocation6], %s31
      %s33 = sshll.u32 [#allocation5], 4
      %s34 = int_to_ptr.vmem [resolvable:$true] %s33
      %39 = dma.hbm_to_vmem [thread:$0]  %s1, 2944, %s34, [#allocation6], 128, 128, 8
    $region9: #{tpu_custom_call.1} parent=1 // pred_fallthru
      _
    // Predicated region
    $region10: #{tpu_custom_call.1} parent=1 // pred_check
      _
    $region11: #{tpu_custom_call.1} parent=1 // pred_check_branch
      %41 = sbr.rel (0) target = $region13
    $region12: #{tpu_custom_call.1} parent=1 // pred_region
      _
    $region13: #{tpu_custom_call.1} parent=1 // pred_fallthru
      _
    // Predicated region
    $region14: #{tpu_custom_call.1} parent=1 // pred_check
      _
    $region15: #{tpu_custom_call.1} parent=1 // pred_check_branch
      %43 = sbr.rel (0) target = $region17
    $region16: #{tpu_custom_call.1} parent=1 // pred_region
      %s45 = ssub.s32 2048, 2048
      %46 = vsyncadd [#allocation6], %s45
      %s47 = sshll.u32 [#allocation7], 4
      %s48 = int_to_ptr.vmem [resolvable:$true] %s47
      %53 = dma.hbm_to_vmem [thread:$0]  %s3, 2048, %s48, [#allocation6], 128, 128, 8
    $region17: #{tpu_custom_call.1} parent=1 // pred_fallthru
      _
    // Predicated region
    $region18: #{tpu_custom_call.1} parent=1 // pred_check
      _
    $region19: #{tpu_custom_call.1} parent=1 // pred_check_branch
      %55 = sbr.rel (0) target = $region21
    $region20: #{tpu_custom_call.1} parent=1 // pred_region
      _
    $region21: #{tpu_custom_call.1} parent=1 // pred_fallthru
      _
    // Predicated region
    $region22: #{tpu_custom_call.1} parent=1 // pred_check
      _
    $region23: #{tpu_custom_call.1} parent=1 // pred_check_branch
      %57 = sbr.rel (0) target = $region25
    $region24: #{tpu_custom_call.1} parent=1 // pred_region
      %s59 = ssub.s32 2048, 2048
      %60 = vsyncadd [#allocation9], %s59
      %s61 = sshll.u32 [#allocation8], 4
      %s62 = int_to_ptr.vmem [resolvable:$true] %s61
      %67 = dma.hbm_to_vmem [thread:$0]  %s5, 2048, %s62, [#allocation9], 128, 128, 8
    $region25: #{tpu_custom_call.1} parent=1 // pred_fallthru
      _
    // Predicated region
    $region26: #{tpu_custom_call.1} parent=1 // pred_check
      _
    $region27: #{tpu_custom_call.1} parent=1 // pred_check_branch
      %69 = sbr.rel (0) target = $region29
    $region28: #{tpu_custom_call.1} parent=1 // pred_region
      _
    $region29: #{tpu_custom_call.1} parent=1 // pred_fallthru
      _
    // Predicated region
    $region30: #{tpu_custom_call.1} parent=1 // pred_check
      _
    $region31: #{tpu_custom_call.1} parent=1 // pred_check_branch
      %71 = sbr.rel (0) target = $region33
    $region32: #{tpu_custom_call.1} parent=1 // pred_region
      %s73 = ssub.s32 2048, 2048
      %74 = vsyncadd [#allocation9], %s73
      %s75 = sshll.u32 [#allocation10], 4
      %s76 = int_to_ptr.vmem [resolvable:$true] %s75
      %81 = dma.hbm_to_vmem [thread:$0]  %s7, 2048, %s76, [#allocation9], 128, 128, 8
    $region33: #{tpu_custom_call.1} parent=1 // pred_fallthru
      _
    // Predicated region
    $region34: #{tpu_custom_call.1} parent=1 // pred_check
      _
    $region35: #{tpu_custom_call.1} parent=1 // pred_check_branch
      %83 = sbr.rel (0) target = $region37
    $region36: #{tpu_custom_call.1} parent=1 // pred_region
      _
    $region37: #{tpu_custom_call.1} parent=1 // pred_fallthru
      _
    // Predicated region
    $region38: #{tpu_custom_call.1} parent=1 // pred_check
      _
    $region39: #{tpu_custom_call.1} parent=1 // pred_check_branch
      %85 = sbr.rel (0) target = $region41
    $region40: #{tpu_custom_call.1} parent=1 // pred_region
      %86 = dma.done [#allocation3], 256
    $region41: #{tpu_custom_call.1} parent=1 // pred_fallthru
      _
    // Predicated region
    $region42: #{tpu_custom_call.1} parent=1 // pred_check
      _
    $region43: #{tpu_custom_call.1} parent=1 // pred_check_branch
      %88 = sbr.rel (0) target = $region45
    $region44: #{tpu_custom_call.1} parent=1 // pred_region
      %89 = dma.done [#allocation6], 2944
    $region45: #{tpu_custom_call.1} parent=1 // pred_fallthru
      _
    // Predicated region
    $region46: #{tpu_custom_call.1} parent=1 // pred_check
      _
    $region47: #{tpu_custom_call.1} parent=1 // pred_check_branch
      %91 = sbr.rel (0) target = $region49
    $region48: #{tpu_custom_call.1} parent=1 // pred_region
      %92 = dma.done [#allocation6], 2048
    $region49: #{tpu_custom_call.1} parent=1 // pred_fallthru
      _
    // Predicated region
    $region50: #{tpu_custom_call.1} parent=1 // pred_check
      _
    $region51: #{tpu_custom_call.1} parent=1 // pred_check_branch
      %94 = sbr.rel (0) target = $region53
    $region52: #{tpu_custom_call.1} parent=1 // pred_region
      %95 = dma.done [#allocation9], 2048
    $region53: #{tpu_custom_call.1} parent=1 // pred_fallthru
      _
    // Predicated region
    $region54: #{tpu_custom_call.1} parent=1 // pred_check
      _
    $region55: #{tpu_custom_call.1} parent=1 // pred_check_branch
      %97 = sbr.rel (0) target = $region57
    $region56: #{tpu_custom_call.1} parent=1 // pred_region
      %98 = dma.done [#allocation9], 2048
    $region57: #{tpu_custom_call.1} parent=1 // pred_fallthru
      _
    %v99 = vld [vmem:[#allocation2] sm:$0xff]
    %v100 = vld [vmem:[#allocation2 + $0x8] sm:$0xff]
    %v101 = vld [vmem:[#allocation5] sm:$0xff]
    %v102 = vld [vmem:[#allocation5 + $0x8] sm:$0xff]
    %v103 = vld [vmem:[#allocation5 + $0x10] sm:$0xff]
    %v104 = vld [vmem:[#allocation5 + $0x18] sm:$0xff]
    %v105 = vld [vmem:[#allocation5 + $0x20] sm:$0xff]
    %v106 = vld [vmem:[#allocation5 + $0x28] sm:$0xff]
    %v107 = vld [vmem:[#allocation5 + $0x30] sm:$0xff]
    %v108 = vld [vmem:[#allocation5 + $0x38] sm:$0xff]
    %v109 = vld [vmem:[#allocation5 + $0x40] sm:$0xff]
    %v110 = vld [vmem:[#allocation5 + $0x48] sm:$0xff]
    %v111 = vld [vmem:[#allocation5 + $0x50] sm:$0xff]
    %v112 = vld [vmem:[#allocation5 + $0x58] sm:$0xff]
    %v113 = vld [vmem:[#allocation5 + $0x60] sm:$0xff]
    %v114 = vld [vmem:[#allocation5 + $0x68] sm:$0xff]
    %v115 = vld [vmem:[#allocation5 + $0x70] sm:$0xff]
    %v116 = vld [vmem:[#allocation5 + $0x78] sm:$0xff]
    %v117 = vld [vmem:[#allocation5 + $0x80] sm:$0xff]
    %v118 = vld [vmem:[#allocation5 + $0x88] sm:$0xff]
    %v119 = vld [vmem:[#allocation5 + $0x90] sm:$0xff]
    %v120 = vld [vmem:[#allocation5 + $0x98] sm:$0xff]
    %v121 = vld [vmem:[#allocation5 + $0xa0] sm:$0xff]
    %v122 = vld [vmem:[#allocation5 + $0xa8] sm:$0xff]
    %v123 = vld [vmem:[#allocation5 + $0xb0] sm:$0xf]
    %v124 = vld [vmem:[%s2] sm:$0x1]
    %v126 = vlaneseq
    %v127 = vshrl.u32 %v126, 7
    %v128 = vsub.s32 0, %v127
    %v129 = vrot.slane %v124, %v128
    %vm131 = vcmask 424960
    %v133 = vsel %vm131, %v100, 0
    %vm135 = vcmask 1043456
    %v137 = vsel %vm135, %v123, 0
    %139 = vmatprep.subr.mxu0 0.0
    %140 = vmatpush1.msra.mxu0 %v101
    %141 = vmatprep.subr.mxu0 0.0
    %142 = vmatpush1.msra.mxu0 %v102
    %143 = vmatprep.subr.mxu0 0.0
    %144 = vmatpush1.msra.mxu0 %v103
    %145 = vmatprep.subr.mxu0 0.0
    %146 = vmatpush1.msra.mxu0 %v104
    %147 = vmatprep.subr.mxu0 0.0
    %148 = vmatpush1.msra.mxu0 %v105
    %149 = vmatprep.subr.mxu0 0.0
    %150 = vmatpush1.msra.mxu0 %v106
    %151 = vmatprep.subr.mxu0 0.0
    %152 = vmatpush1.msra.mxu0 %v107
    %153 = vmatprep.subr.mxu0 0.0
    %154 = vmatpush1.msra.mxu0 %v108
    %155 = vmatprep.subr.mxu0 0.0
    %156 = vmatpush1.msra.mxu0 %v109
    %157 = vmatprep.subr.mxu0 0.0
    %158 = vmatpush1.msra.mxu0 %v110
    %159 = vmatprep.subr.mxu0 0.0
    %160 = vmatpush1.msra.mxu0 %v111
    %161 = vmatprep.subr.mxu0 0.0
    %162 = vmatpush1.msra.mxu0 %v112
    %163 = vmatprep.subr.mxu0 0.0
    %164 = vmatpush1.msra.mxu0 %v113
    %165 = vmatprep.subr.mxu0 0.0
    %166 = vmatpush1.msra.mxu0 %v114
    %167 = vmatprep.subr.mxu0 0.0
    %168 = vmatpush1.msra.mxu0 %v115
    %169 = vmatprep.subr.mxu0 0.0
    %170 = vmatpush1.msra.mxu0 %v116
    %171 = vmatprep.subr.mxu0 0.0
    %172 = vmatpush1.msra.mxu0 %v117
    %173 = vmatprep.subr.mxu0 0.0
    %174 = vmatpush1.msra.mxu0 %v118
    %175 = vmatprep.subr.mxu0 0.0
    %176 = vmatpush1.msra.mxu0 %v119
    %177 = vmatprep.subr.mxu0 0.0
    %178 = vmatpush1.msra.mxu0 %v120
    %179 = vmatprep.subr.mxu0 0.0
    %180 = vmatpush1.msra.mxu0 %v121
    %181 = vmatprep.subr.mxu0 0.0
    %182 = vmatpush1.msra.mxu0 %v122
    %183 = vmatprep.subr.mxu0 0.0
    %184 = vmatpush1.msra.mxu0 %v137
    %185 = vmatprep.subr.mxu0 0.0
    %186 = vmatpush1.msra.mxu0 0.0
    %187 = vmatprep.subr.mxu0 0.0
    %188 = vmatpush1.msra.mxu0 0.0
    %189 = vmatprep.subr.mxu0 0.0
    %190 = vmatpush1.msra.mxu0 0.0
    %191 = vmatprep.subr.mxu0 0.0
    %192 = vmatpush1.msra.mxu0 0.0
    %193 = vmatprep.subr.mxu0 0.0
    %194 = vmatpush1.msra.mxu0 0.0
    %195 = vmatprep.subr.mxu0 0.0
    %196 = vmatpush1.msra.mxu0 0.0
    %197 = vmatprep.subr.mxu0 0.0
    %198 = vmatpush1.msra.mxu0 0.0
    %199 = vmatprep.subr.mxu0 0.0
    %200 = vmatpush1.msra.mxu0 0.0
    %201 = vmatprep.subr.mxu0 0.0
    %202 = vmatpush1.msra.mxu0 0.0
    %203 = vmatprep.mubr.f32.mxu0 %v133
    %204 = vmatmul.mubr.f32.gmra.mrb[0].mxu0 %v99
    %v205 = vpop.f32.mrb[0].mxu0
    %v206 = vadd.f32 %v129, %v205
    %v207 = vpop.f32.mrb[0].mxu0
    %208 = vdwg.mxu0
    %v209 = vmax.f32 %v206, 0.0
    %v210 = vld [vmem:[#allocation7] sm:$0xff]
    %v211 = vld [vmem:[#allocation7 + $0x8] sm:$0xff]
    %v212 = vld [vmem:[#allocation7 + $0x10] sm:$0xff]
    %v213 = vld [vmem:[#allocation7 + $0x18] sm:$0xff]
    %v214 = vld [vmem:[#allocation7 + $0x20] sm:$0xff]
    %v215 = vld [vmem:[#allocation7 + $0x28] sm:$0xff]
    %v216 = vld [vmem:[#allocation7 + $0x30] sm:$0xff]
    %v217 = vld [vmem:[#allocation7 + $0x38] sm:$0xff]
    %v218 = vld [vmem:[#allocation7 + $0x40] sm:$0xff]
    %v219 = vld [vmem:[#allocation7 + $0x48] sm:$0xff]
    %v220 = vld [vmem:[#allocation7 + $0x50] sm:$0xff]
    %v221 = vld [vmem:[#allocation7 + $0x58] sm:$0xff]
    %v222 = vld [vmem:[#allocation7 + $0x60] sm:$0xff]
    %v223 = vld [vmem:[#allocation7 + $0x68] sm:$0xff]
    %v224 = vld [vmem:[#allocation7 + $0x70] sm:$0xff]
    %v225 = vld [vmem:[#allocation7 + $0x78] sm:$0xff]
    %v226 = vld [vmem:[%s4] sm:$0x1]
    %v228 = vlaneseq
    %v229 = vshrl.u32 %v228, 7
    %v230 = vsub.s32 0, %v229
    %v231 = vrot.slane %v226, %v230
    %233 = vmatprep.subr.mxu0 0.0
    %234 = vmatpush1.msra.mxu0 %v210
    %235 = vmatprep.subr.mxu0 0.0
    %236 = vmatpush1.msra.mxu0 %v211
    %237 = vmatprep.subr.mxu0 0.0
    %238 = vmatpush1.msra.mxu0 %v212
    %239 = vmatprep.subr.mxu0 0.0
    %240 = vmatpush1.msra.mxu0 %v213
    %241 = vmatprep.subr.mxu0 0.0
    %242 = vmatpush1.msra.mxu0 %v214
    %243 = vmatprep.subr.mxu0 0.0
    %244 = vmatpush1.msra.mxu0 %v215
    %245 = vmatprep.subr.mxu0 0.0
    %246 = vmatpush1.msra.mxu0 %v216
    %247 = vmatprep.subr.mxu0 0.0
    %248 = vmatpush1.msra.mxu0 %v217
    %249 = vmatprep.subr.mxu0 0.0
    %250 = vmatpush1.msra.mxu0 %v218
    %251 = vmatprep.subr.mxu0 0.0
    %252 = vmatpush1.msra.mxu0 %v219
    %253 = vmatprep.subr.mxu0 0.0
    %254 = vmatpush1.msra.mxu0 %v220
    %255 = vmatprep.subr.mxu0 0.0
    %256 = vmatpush1.msra.mxu0 %v221
    %257 = vmatprep.subr.mxu0 0.0
    %258 = vmatpush1.msra.mxu0 %v222
    %259 = vmatprep.subr.mxu0 0.0
    %260 = vmatpush1.msra.mxu0 %v223
    %261 = vmatprep.subr.mxu0 0.0
    %262 = vmatpush1.msra.mxu0 %v224
    %263 = vmatprep.subr.mxu0 0.0
    %264 = vmatpush1.msra.mxu0 %v225
    %265 = vmatprep.subr.mxu0 0.0
    %266 = vmatpush1.msra.mxu0 0.0
    %267 = vmatprep.subr.mxu0 0.0
    %268 = vmatpush1.msra.mxu0 0.0
    %269 = vmatprep.subr.mxu0 0.0
    %270 = vmatpush1.msra.mxu0 0.0
    %271 = vmatprep.subr.mxu0 0.0
    %272 = vmatpush1.msra.mxu0 0.0
    %273 = vmatprep.subr.mxu0 0.0
    %274 = vmatpush1.msra.mxu0 0.0
    %275 = vmatprep.subr.mxu0 0.0
    %276 = vmatpush1.msra.mxu0 0.0
    %277 = vmatprep.subr.mxu0 0.0
    %278 = vmatpush1.msra.mxu0 0.0
    %279 = vmatprep.subr.mxu0 0.0
    %280 = vmatpush1.msra.mxu0 0.0
    %281 = vmatprep.subr.mxu0 0.0
    %282 = vmatpush1.msra.mxu0 0.0
    %283 = vmatprep.subr.mxu0 0.0
    %284 = vmatpush1.msra.mxu0 0.0
    %285 = vmatprep.subr.mxu0 0.0
    %286 = vmatpush1.msra.mxu0 0.0
    %287 = vmatprep.subr.mxu0 0.0
    %288 = vmatpush1.msra.mxu0 0.0
    %289 = vmatprep.subr.mxu0 0.0
    %290 = vmatpush1.msra.mxu0 0.0
    %291 = vmatprep.subr.mxu0 0.0
    %292 = vmatpush1.msra.mxu0 0.0
    %293 = vmatprep.subr.mxu0 0.0
    %294 = vmatpush1.msra.mxu0 0.0
    %295 = vmatprep.subr.mxu0 0.0
    %296 = vmatpush1.msra.mxu0 0.0
    %297 = vmatprep.mubr.f32.mxu0 0.0
    %298 = vmatmul.mubr.f32.gmra.mrb[0].mxu0 %v209
    %v299 = vpop.f32.mrb[0].mxu0
    %v300 = vadd.f32 %v231, %v299
    %v301 = vpop.f32.mrb[0].mxu0
    %302 = vdwg.mxu0
    %v303 = vmax.f32 %v300, 0.0
    %v304 = vld [vmem:[#allocation8] sm:$0xff]
    %v305 = vld [vmem:[#allocation8 + $0x8] sm:$0xff]
    %v306 = vld [vmem:[#allocation8 + $0x10] sm:$0xff]
    %v307 = vld [vmem:[#allocation8 + $0x18] sm:$0xff]
    %v308 = vld [vmem:[#allocation8 + $0x20] sm:$0xff]
    %v309 = vld [vmem:[#allocation8 + $0x28] sm:$0xff]
    %v310 = vld [vmem:[#allocation8 + $0x30] sm:$0xff]
    %v311 = vld [vmem:[#allocation8 + $0x38] sm:$0xff]
    %v312 = vld [vmem:[#allocation8 + $0x40] sm:$0xff]
    %v313 = vld [vmem:[#allocation8 + $0x48] sm:$0xff]
    %v314 = vld [vmem:[#allocation8 + $0x50] sm:$0xff]
    %v315 = vld [vmem:[#allocation8 + $0x58] sm:$0xff]
    %v316 = vld [vmem:[#allocation8 + $0x60] sm:$0xff]
    %v317 = vld [vmem:[#allocation8 + $0x68] sm:$0xff]
    %v318 = vld [vmem:[#allocation8 + $0x70] sm:$0xff]
    %v319 = vld [vmem:[#allocation8 + $0x78] sm:$0xff]
    %v320 = vld [vmem:[%s6] sm:$0x1]
    %v322 = vlaneseq
    %v323 = vshrl.u32 %v322, 7
    %v324 = vsub.s32 0, %v323
    %v325 = vrot.slane %v320, %v324
    %327 = vmatprep.subr.mxu0 0.0
    %328 = vmatpush1.msra.mxu0 %v304
    %329 = vmatprep.subr.mxu0 0.0
    %330 = vmatpush1.msra.mxu0 %v305
    %331 = vmatprep.subr.mxu0 0.0
    %332 = vmatpush1.msra.mxu0 %v306
    %333 = vmatprep.subr.mxu0 0.0
    %334 = vmatpush1.msra.mxu0 %v307
    %335 = vmatprep.subr.mxu0 0.0
    %336 = vmatpush1.msra.mxu0 %v308
    %337 = vmatprep.subr.mxu0 0.0
    %338 = vmatpush1.msra.mxu0 %v309
    %339 = vmatprep.subr.mxu0 0.0
    %340 = vmatpush1.msra.mxu0 %v310
    %341 = vmatprep.subr.mxu0 0.0
    %342 = vmatpush1.msra.mxu0 %v311
    %343 = vmatprep.subr.mxu0 0.0
    %344 = vmatpush1.msra.mxu0 %v312
    %345 = vmatprep.subr.mxu0 0.0
    %346 = vmatpush1.msra.mxu0 %v313
    %347 = vmatprep.subr.mxu0 0.0
    %348 = vmatpush1.msra.mxu0 %v314
    %349 = vmatprep.subr.mxu0 0.0
    %350 = vmatpush1.msra.mxu0 %v315
    %351 = vmatprep.subr.mxu0 0.0
    %352 = vmatpush1.msra.mxu0 %v316
    %353 = vmatprep.subr.mxu0 0.0
    %354 = vmatpush1.msra.mxu0 %v317
    %355 = vmatprep.subr.mxu0 0.0
    %356 = vmatpush1.msra.mxu0 %v318
    %357 = vmatprep.subr.mxu0 0.0
    %358 = vmatpush1.msra.mxu0 %v319
    %359 = vmatprep.subr.mxu0 0.0
    %360 = vmatpush1.msra.mxu0 0.0
    %361 = vmatprep.subr.mxu0 0.0
    %362 = vmatpush1.msra.mxu0 0.0
    %363 = vmatprep.subr.mxu0 0.0
    %364 = vmatpush1.msra.mxu0 0.0
    %365 = vmatprep.subr.mxu0 0.0
    %366 = vmatpush1.msra.mxu0 0.0
    %367 = vmatprep.subr.mxu0 0.0
    %368 = vmatpush1.msra.mxu0 0.0
    %369 = vmatprep.subr.mxu0 0.0
    %370 = vmatpush1.msra.mxu0 0.0
    %371 = vmatprep.subr.mxu0 0.0
    %372 = vmatpush1.msra.mxu0 0.0
    %373 = vmatprep.subr.mxu0 0.0
    %374 = vmatpush1.msra.mxu0 0.0
    %375 = vmatprep.subr.mxu0 0.0
    %376 = vmatpush1.msra.mxu0 0.0
    %377 = vmatprep.subr.mxu0 0.0
    %378 = vmatpush1.msra.mxu0 0.0
    %379 = vmatprep.subr.mxu0 0.0
    %380 = vmatpush1.msra.mxu0 0.0
    %381 = vmatprep.subr.mxu0 0.0
    %382 = vmatpush1.msra.mxu0 0.0
    %383 = vmatprep.subr.mxu0 0.0
    %384 = vmatpush1.msra.mxu0 0.0
    %385 = vmatprep.subr.mxu0 0.0
    %386 = vmatpush1.msra.mxu0 0.0
    %387 = vmatprep.subr.mxu0 0.0
    %388 = vmatpush1.msra.mxu0 0.0
    %389 = vmatprep.subr.mxu0 0.0
    %390 = vmatpush1.msra.mxu0 0.0
    %391 = vmatprep.mubr.f32.mxu0 0.0
    %392 = vmatmul.mubr.f32.gmra.mrb[0].mxu0 %v303
    %v393 = vpop.f32.mrb[0].mxu0
    %v394 = vadd.f32 %v325, %v393
    %v395 = vpop.f32.mrb[0].mxu0
    %396 = vdwg.mxu0
    %v397 = vmax.f32 %v394, 0.0
    %v398 = vld [vmem:[#allocation10] sm:$0xff]
    %v399 = vld [vmem:[#allocation10 + $0x8] sm:$0xff]
    %v400 = vld [vmem:[#allocation10 + $0x10] sm:$0xff]
    %v401 = vld [vmem:[#allocation10 + $0x18] sm:$0xff]
    %v402 = vld [vmem:[#allocation10 + $0x20] sm:$0xff]
    %v403 = vld [vmem:[#allocation10 + $0x28] sm:$0xff]
    %v404 = vld [vmem:[#allocation10 + $0x30] sm:$0xff]
    %v405 = vld [vmem:[#allocation10 + $0x38] sm:$0xff]
    %v406 = vld [vmem:[#allocation10 + $0x40] sm:$0xff]
    %v407 = vld [vmem:[#allocation10 + $0x48] sm:$0xff]
    %v408 = vld [vmem:[#allocation10 + $0x50] sm:$0xff]
    %v409 = vld [vmem:[#allocation10 + $0x58] sm:$0xff]
    %v410 = vld [vmem:[#allocation10 + $0x60] sm:$0xff]
    %v411 = vld [vmem:[#allocation10 + $0x68] sm:$0xff]
    %v412 = vld [vmem:[#allocation10 + $0x70] sm:$0xff]
    %v413 = vld [vmem:[#allocation10 + $0x78] sm:$0xff]
    %v414 = vld [vmem:[%s8] sm:$0x1]
    %v416 = vlaneseq
    %v417 = vshrl.u32 %v416, 7
    %v418 = vsub.s32 0, %v417
    %v419 = vrot.slane %v414, %v418
    %421 = vmatprep.subr.mxu0 0.0
    %422 = vmatpush1.msra.mxu0 %v398
    %423 = vmatprep.subr.mxu0 0.0
    %424 = vmatpush1.msra.mxu0 %v399
    %425 = vmatprep.subr.mxu0 0.0
    %426 = vmatpush1.msra.mxu0 %v400
    %427 = vmatprep.subr.mxu0 0.0
    %428 = vmatpush1.msra.mxu0 %v401
    %429 = vmatprep.subr.mxu0 0.0
    %430 = vmatpush1.msra.mxu0 %v402
    %431 = vmatprep.subr.mxu0 0.0
    %432 = vmatpush1.msra.mxu0 %v403
    %433 = vmatprep.subr.mxu0 0.0
    %434 = vmatpush1.msra.mxu0 %v404
    %435 = vmatprep.subr.mxu0 0.0
    %436 = vmatpush1.msra.mxu0 %v405
    %437 = vmatprep.subr.mxu0 0.0
    %438 = vmatpush1.msra.mxu0 %v406
    %439 = vmatprep.subr.mxu0 0.0
    %440 = vmatpush1.msra.mxu0 %v407
    %441 = vmatprep.subr.mxu0 0.0
    %442 = vmatpush1.msra.mxu0 %v408
    %443 = vmatprep.subr.mxu0 0.0
    %444 = vmatpush1.msra.mxu0 %v409
    %445 = vmatprep.subr.mxu0 0.0
    %446 = vmatpush1.msra.mxu0 %v410
    %447 = vmatprep.subr.mxu0 0.0
    %448 = vmatpush1.msra.mxu0 %v411
    %449 = vmatprep.subr.mxu0 0.0
    %450 = vmatpush1.msra.mxu0 %v412
    %451 = vmatprep.subr.mxu0 0.0
    %452 = vmatpush1.msra.mxu0 %v413
    %453 = vmatprep.subr.mxu0 0.0
    %454 = vmatpush1.msra.mxu0 0.0
    %455 = vmatprep.subr.mxu0 0.0
    %456 = vmatpush1.msra.mxu0 0.0
    %457 = vmatprep.subr.mxu0 0.0
    %458 = vmatpush1.msra.mxu0 0.0
    %459 = vmatprep.subr.mxu0 0.0
    %460 = vmatpush1.msra.mxu0 0.0
    %461 = vmatprep.subr.mxu0 0.0
    %462 = vmatpush1.msra.mxu0 0.0
    %463 = vmatprep.subr.mxu0 0.0
    %464 = vmatpush1.msra.mxu0 0.0
    %465 = vmatprep.subr.mxu0 0.0
    %466 = vmatpush1.msra.mxu0 0.0
    %467 = vmatprep.subr.mxu0 0.0
    %468 = vmatpush1.msra.mxu0 0.0
    %469 = vmatprep.subr.mxu0 0.0
    %470 = vmatpush1.msra.mxu0 0.0
    %471 = vmatprep.subr.mxu0 0.0
    %472 = vmatpush1.msra.mxu0 0.0
    %473 = vmatprep.subr.mxu0 0.0
    %474 = vmatpush1.msra.mxu0 0.0
    %475 = vmatprep.subr.mxu0 0.0
    %476 = vmatpush1.msra.mxu0 0.0
    %477 = vmatprep.subr.mxu0 0.0
    %478 = vmatpush1.msra.mxu0 0.0
    %479 = vmatprep.subr.mxu0 0.0
    %480 = vmatpush1.msra.mxu0 0.0
    %481 = vmatprep.subr.mxu0 0.0
    %482 = vmatpush1.msra.mxu0 0.0
    %483 = vmatprep.subr.mxu0 0.0
    %484 = vmatpush1.msra.mxu0 0.0
    %485 = vmatprep.mubr.f32.mxu0 0.0
    %486 = vmatmul.mubr.f32.gmra.mrb[0].mxu0 %v397
    %v487 = vpop.f32.mrb[0].mxu0
    %v488 = vadd.f32 %v419, %v487
    %v489 = vpop.f32.mrb[0].mxu0
    %490 = vdwg.mxu0
    %v491 = vxor.u32 %v488, 2147483648
    %v492 = vmul.f32 %v491, 1.442695
    %v493 = vpow.pop %v492
    %v494 = vadd.f32 %v493, 1.0
    %v495 = vrcp.pop %v494
    %v496 = vmul.f32 1.0, %v495
    %497 = vst [vmem:[#allocation11] sm:$0xff] %v496
    // Predicated region
    $region58: #{tpu_custom_call.1} parent=1 // pred_check
      _
    $region59: #{tpu_custom_call.1} parent=1 // pred_check_branch
      %499 = sbr.rel (0) target = $region61
    $region60: #{tpu_custom_call.1} parent=1 // pred_region
      %s501 = ssub.s32 128, 128
      %502 = vsyncadd [#allocation4], %s501
      %s504 = sshll.u32 [#allocation11], 4
      %s505 = int_to_ptr.vmem [resolvable:$true] %s504
      %507 = dma.vmem_to_hbm [thread:$0]  %s505, 128, %s9, [#allocation4]
    $region61: #{tpu_custom_call.1} parent=1 // pred_fallthru
      _
    // Predicated region
    $region62: #{tpu_custom_call.1} parent=1 // pred_check
      _
    $region63: #{tpu_custom_call.1} parent=1 // pred_check_branch
      %509 = sbr.rel (0) target = $region65
    $region64: #{tpu_custom_call.1} parent=1 // pred_region
      %510 = dma.done [#allocation4], 128
    $region65: #{tpu_custom_call.1} parent=1 // pred_fallthru
      _
    %511 = vsyncpa [#allocation3], 1
    %512 = vsyncpa [#allocation6], 1
    %513 = vsyncpa [#allocation9], 1
    %514 = vsyncpa [#allocation4], 1

</llo_original>
